<compile_context>
chip_gen: v7x
topology: tpu7x:2x2x1
jax: 0.10.0
libtpu: 0.0.40
codegen_flags: <defaults>
</compile_context>

<pallas_src>
import math

import jax
import jax.numpy as jnp
from jax.experimental import pallas as pl
from jax.experimental.pallas import tpu as pltpu  # noqa: F401  (kept for TPU-specific tuning hooks)


def _tr_fused_kernel(xe_ref, st_ref, w_ref, o_ref):
    """Single-invocation fused kernel (no grid; all operands resident in VMEM).

    xe_ref : (B, m*m)        x expanded along lanes: xe[i, c*m+k] = x[i, c]
    st_ref : (1, m*m)        state tiled along lanes: st[0, c*m+k] = state[0, k]
    w_ref  : (m*m, m*r1*r2)  weight permuted to rows (c,k), cols (a,b,s)
    o_ref  : (B, m*r1*r2)    lane-dense fused output
    """
    # Outer product x ⊗ state, flattened over (c,k): one VPU broadcast-multiply.
    xs = xe_ref[...] * st_ref[...]                                  # (B, m*m)
    # Both contractions (over c and k) in a single MXU pass.
    o_ref[...] = jnp.dot(xs, w_ref[...],
                         preferred_element_type=jnp.float32).astype(o_ref.dtype)


def tensor_ring_forward(x, state, weight):
    """x: (B, m) f32, state: (1, m) f32, weight: (m, r1, m, m, r2) f32.
    Returns out: (m, r1, B, r2) f32, matching the PyTorch module."""
    m, r1, mc, mk, r2 = weight.shape
    assert mc == m and mk == m
    B = x.shape[0]
    assert x.shape == (B, m) and state.shape == (1, m)
    n_out = m * r1 * r2

    # One-time layout plumbing (wrapper side, not compute hoisting):
    #   W2[(c,k), (a,b,s)] = W[a,b,c,k,s]
    w2 = jnp.transpose(weight, (2, 3, 0, 1, 4)).reshape(m * m, n_out)
    #   xe[i, c*m+k] = x[i, c]   ;   st[0, c*m+k] = state[0, k]
    x_exp = jnp.repeat(x, m, axis=1)        # (B, m*m)
    st_tiled = jnp.tile(state, (1, m))      # (1, m*m)

    flops = 2 * B * (m * m) * n_out
    bytes_accessed = 4 * (m * m * n_out + B * m * m + m * m + B * n_out)

    out_flat = pl.pallas_call(
        _tr_fused_kernel,
        out_shape=jax.ShapeDtypeStruct((B, n_out), jnp.float32),
        # No grid: single invocation, every operand (weight is only a few KiB at these
        # sizes) lives fully in VMEM; output last dim is a multiple of 128 -> unmasked stores.
        cost_estimate=pl.CostEstimate(
            flops=flops, transcendentals=0, bytes_accessed=bytes_accessed),
    )(x_exp, st_tiled, w2)

    # Restore the PyTorch output layout (m, r1, B, r2).
    return out_flat.reshape(B, m, r1, r2).transpose(1, 2, 0, 3)


if __name__ == "__main__":
    # Module hyper-parameters (amount_of_categories is unused by forward()).
    amount_of_categories = 3  # TODO(synk): unused in the reference forward pass
    first_rank, m, second_rank = 4, 8, 4
    B = 2

    key = jax.random.PRNGKey(0)
    kw, kx, ks = jax.random.split(key, 3)

    # Deterministic kaiming_uniform_(a=sqrt(5)) init:
    # fan_in = prod(shape[1:]) = r1*m*m*r2, bound = 1/sqrt(fan_in).
    fan_in = first_rank * m * m * second_rank
    bound = 1.0 / math.sqrt(fan_in)
    weight = jax.random.uniform(
        kw, (m, first_rank, m, m, second_rank), jnp.float32, -bound, bound)

    x = jax.random.normal(kx, (B, m), jnp.float32)
    state = jax.random.normal(ks, (1, m), jnp.float32)

    out = jax.block_until_ready(tensor_ring_forward(x, state, weight))

    # Pure-JAX reference of the PyTorch forward.
    p_ref = jnp.einsum("k,abcks->abcs", state[0], weight)
    out_ref = jnp.einsum("ic,abcs->abis", x, p_ref)

    assert out.shape == (m, first_rank, B, second_rank)
    assert jnp.allclose(out, out_ref, rtol=1e-5, atol=1e-5), "mismatch vs reference"
    print("KERNEL_OK")
</pallas_src>

<mosaic_0001>
module attributes {stable_mosaic.version = 11 : i64} {
  func.func @_tr_fused_kernel(%arg0: memref<2x64xf32, #tpu.memory_space<vmem>>, %arg1: memref<1x64xf32, #tpu.memory_space<vmem>>, %arg2: memref<64x128xf32, #tpu.memory_space<vmem>>, %arg3: memref<2x128xf32, #tpu.memory_space<vmem>>) attributes {dimension_semantics = [], scalar_prefetch = 0 : i64, scratch_operands = 0 : i64, tpu.core_type = #tpu.core_type<tc>} {
    %c0 = arith.constant 0 : index
    %c0_0 = arith.constant 0 : index
    %0 = vector.load %arg0[%c0, %c0_0] : memref<2x64xf32, #tpu.memory_space<vmem>>, vector<2x64xf32>
    %c0_1 = arith.constant 0 : index
    %c0_2 = arith.constant 0 : index
    %1 = vector.load %arg1[%c0_1, %c0_2] : memref<1x64xf32, #tpu.memory_space<vmem>>, vector<1x64xf32>
    %2 = vector.broadcast %1 : vector<1x64xf32> to vector<2x64xf32>
    %3 = arith.mulf %0, %2 : vector<2x64xf32>
    %c0_3 = arith.constant 0 : index
    %c0_4 = arith.constant 0 : index
    %4 = vector.load %arg2[%c0_3, %c0_4] : memref<64x128xf32, #tpu.memory_space<vmem>>, vector<64x128xf32>
    %cst = arith.constant dense<0.000000e+00> : vector<2x128xf32>
    %5 = tpu.matmul %3, %4, %cst {dimension_numbers = #tpu.dot_dimension_numbers<[1], [0], [0], [1], [0, 0, 1, 1], [], []>} : vector<2x64xf32>, vector<64x128xf32>, vector<2x128xf32> -> vector<2x128xf32>
    %c0_5 = arith.constant 0 : index
    %c0_6 = arith.constant 0 : index
    %6 = vector.load %arg3[%c0_5, %c0_6] : memref<2x128xf32, #tpu.memory_space<vmem>>, vector<2x128xf32>
    tpu.vector_store %arg3[%c0_5, %c0_6], %5 {strides = array<i32>} : memref<2x128xf32, #tpu.memory_space<vmem>>, vector<2x128xf32>,
    return
  }
}

</mosaic_0001>

<llo_original>
// kernel: tpu_custom_call.1
$region0: #{tpu_custom_call.1}
  #allocation0 [shape = 'u32[]', space=smem, size = 0x4, offset = 0x4, fixed_abs, tag = 'smem constant byte address 0x4 - core index']
  #allocation1 [shape = 'u32[144,128]{1,0:T(1,128)}', space=vmem, size = 0x12000, scoped, tag = 'internal scratch']
  %s0 = inlined_call_operand.hbm [shape: f32[2,64], index: 0, kind: input, shape index: {}]
  %s1 = inlined_call_operand.vmem [shape: f32[1,64], index: 1, kind: input, shape index: {}]
  %s2 = inlined_call_operand.hbm [shape: f32[64,128], index: 2, kind: input, shape index: {}]
  %s3 = inlined_call_operand.hbm [shape: f32[2,128], index: 3, kind: output, shape index: {}]
  %s4 = sld [smem:[#allocation0]]
  $region30: #{tpu_custom_call.1} parent=0
    _
  %s6 = ssub.s32 1, %s4
  %s7 = scalar_select 0, %s6, %s4
  $region1: #{tpu_custom_call.1} parent=0
    #allocation2 [shape = 'u8[1024]{0}', space=vmem, size = 0x400, scoped, tag = 'input window, operand 0, single buffered']
    #allocation3 [shape = 's32[1]{0}', space=sflag, size = 0x4, scoped, tag = 'scoped memory for tpu_custom_call.1']
    #allocation4 [shape = 's32[1]{0}', space=sflag, size = 0x4, scoped, tag = 'scoped memory for tpu_custom_call.1']
    #allocation5 [shape = 'u8[32768]{0}', space=vmem, size = 0x8000, scoped, tag = 'input window, operand 2, single buffered']
    #allocation6 [shape = 's32[1]{0}', space=sflag, size = 0x4, scoped, tag = 'scoped memory for tpu_custom_call.1']
    #allocation7 [shape = 'u8[1024]{0}', space=vmem, size = 0x400, scoped, tag = 'output window, operand 0, single buffered']
    %8 = vsyncpa [#allocation3], 0
    %9 = vsyncpa [#allocation6], 0
    %10 = vsyncpa [#allocation4], 0
    // Predicated region
    $region2: #{tpu_custom_call.1} parent=1 // pred_check
      _
    $region3: #{tpu_custom_call.1} parent=1 // pred_check_branch
      %12 = sbr.rel (0) target = $region5
    $region4: #{tpu_custom_call.1} parent=1 // pred_region
      %s14 = ssub.s32 32, 32
      %15 = vsyncadd [#allocation3], %s14
      %s17 = sshll.u32 [#allocation2], 4
      %s18 = int_to_ptr.vmem [resolvable:$true] %s17
      %20 = dma.hbm_to_vmem [thread:$0]  %s0, 32, %s18, [#allocation3]
    $region5: #{tpu_custom_call.1} parent=1 // pred_fallthru
      _
    // Predicated region
    $region6: #{tpu_custom_call.1} parent=1 // pred_check
      _
    $region7: #{tpu_custom_call.1} parent=1 // pred_check_branch
      %22 = sbr.rel (0) target = $region9
    $region8: #{tpu_custom_call.1} parent=1 // pred_region
      _
    $region9: #{tpu_custom_call.1} parent=1 // pred_fallthru
      _
    // Predicated region
    $region10: #{tpu_custom_call.1} parent=1 // pred_check
      _
    $region11: #{tpu_custom_call.1} parent=1 // pred_check_branch
      %24 = sbr.rel (0) target = $region13
    $region12: #{tpu_custom_call.1} parent=1 // pred_region
      %s26 = ssub.s32 1024, 1024
      %27 = vsyncadd [#allocation6], %s26
      %s28 = sshll.u32 [#allocation5], 4
      %s29 = int_to_ptr.vmem [resolvable:$true] %s28
      %34 = dma.hbm_to_vmem [thread:$0]  %s2, 1024, %s29, [#allocation6], 128, 128, 8
    $region13: #{tpu_custom_call.1} parent=1 // pred_fallthru
      _
    // Predicated region
    $region14: #{tpu_custom_call.1} parent=1 // pred_check
      _
    $region15: #{tpu_custom_call.1} parent=1 // pred_check_branch
      %36 = sbr.rel (0) target = $region17
    $region16: #{tpu_custom_call.1} parent=1 // pred_region
      %37 = dma.done [#allocation3], 32
    $region17: #{tpu_custom_call.1} parent=1 // pred_fallthru
      _
    // Predicated region
    $region18: #{tpu_custom_call.1} parent=1 // pred_check
      _
    $region19: #{tpu_custom_call.1} parent=1 // pred_check_branch
      %39 = sbr.rel (0) target = $region21
    $region20: #{tpu_custom_call.1} parent=1 // pred_region
      %40 = dma.done [#allocation6], 1024
    $region21: #{tpu_custom_call.1} parent=1 // pred_fallthru
      _
    %v41 = vld [vmem:[#allocation2] sm:$0x3]
    %v42 = vld [vmem:[%s1] sm:$0x1]
    %v44 = vlaneseq
    %v45 = vshrl.u32 %v44, 7
    %v46 = vsub.s32 0, %v45
    %v47 = vrot.slane %v42, %v46
    %v49 = vmul.f32 %v41, %v47
    %v50 = vld [vmem:[#allocation5] sm:$0xff]
    %v51 = vld [vmem:[#allocation5 + $0x8] sm:$0xff]
    %v52 = vld [vmem:[#allocation5 + $0x10] sm:$0xff]
    %v53 = vld [vmem:[#allocation5 + $0x18] sm:$0xff]
    %v54 = vld [vmem:[#allocation5 + $0x20] sm:$0xff]
    %v55 = vld [vmem:[#allocation5 + $0x28] sm:$0xff]
    %v56 = vld [vmem:[#allocation5 + $0x30] sm:$0xff]
    %v57 = vld [vmem:[#allocation5 + $0x38] sm:$0xff]
    %vm58 = vcmask 523264
    %v60 = vsel %vm58, %v49, 0
    %62 = vmatprep.subr.mxu0 0.0
    %63 = vmatpush1.msra.mxu0 %v50
    %64 = vmatprep.subr.mxu0 0.0
    %65 = vmatpush1.msra.mxu0 %v51
    %66 = vmatprep.subr.mxu0 0.0
    %67 = vmatpush1.msra.mxu0 %v52
    %68 = vmatprep.subr.mxu0 0.0
    %69 = vmatpush1.msra.mxu0 %v53
    %70 = vmatprep.subr.mxu0 0.0
    %71 = vmatpush1.msra.mxu0 %v54
    %72 = vmatprep.subr.mxu0 0.0
    %73 = vmatpush1.msra.mxu0 %v55
    %74 = vmatprep.subr.mxu0 0.0
    %75 = vmatpush1.msra.mxu0 %v56
    %76 = vmatprep.subr.mxu0 0.0
    %77 = vmatpush1.msra.mxu0 %v57
    %78 = vmatprep.subr.mxu0 0.0
    %79 = vmatpush1.msra.mxu0 0.0
    %80 = vmatprep.subr.mxu0 0.0
    %81 = vmatpush1.msra.mxu0 0.0
    %82 = vmatprep.subr.mxu0 0.0
    %83 = vmatpush1.msra.mxu0 0.0
    %84 = vmatprep.subr.mxu0 0.0
    %85 = vmatpush1.msra.mxu0 0.0
    %86 = vmatprep.subr.mxu0 0.0
    %87 = vmatpush1.msra.mxu0 0.0
    %88 = vmatprep.subr.mxu0 0.0
    %89 = vmatpush1.msra.mxu0 0.0
    %90 = vmatprep.subr.mxu0 0.0
    %91 = vmatpush1.msra.mxu0 0.0
    %92 = vmatprep.subr.mxu0 0.0
    %93 = vmatpush1.msra.mxu0 0.0
    %94 = vmatprep.subr.mxu0 0.0
    %95 = vmatpush1.msra.mxu0 0.0
    %96 = vmatprep.subr.mxu0 0.0
    %97 = vmatpush1.msra.mxu0 0.0
    %98 = vmatprep.subr.mxu0 0.0
    %99 = vmatpush1.msra.mxu0 0.0
    %100 = vmatprep.subr.mxu0 0.0
    %101 = vmatpush1.msra.mxu0 0.0
    %102 = vmatprep.subr.mxu0 0.0
    %103 = vmatpush1.msra.mxu0 0.0
    %104 = vmatprep.subr.mxu0 0.0
    %105 = vmatpush1.msra.mxu0 0.0
    %106 = vmatprep.subr.mxu0 0.0
    %107 = vmatpush1.msra.mxu0 0.0
    %108 = vmatprep.subr.mxu0 0.0
    %109 = vmatpush1.msra.mxu0 0.0
    %110 = vmatprep.subr.mxu0 0.0
    %111 = vmatpush1.msra.mxu0 0.0
    %112 = vmatprep.subr.mxu0 0.0
    %113 = vmatpush1.msra.mxu0 0.0
    %114 = vmatprep.subr.mxu0 0.0
    %115 = vmatpush1.msra.mxu0 0.0
    %116 = vmatprep.subr.mxu0 0.0
    %117 = vmatpush1.msra.mxu0 0.0
    %118 = vmatprep.subr.mxu0 0.0
    %119 = vmatpush1.msra.mxu0 0.0
    %120 = vmatprep.subr.mxu0 0.0
    %121 = vmatpush1.msra.mxu0 0.0
    %122 = vmatprep.subr.mxu0 0.0
    %123 = vmatpush1.msra.mxu0 0.0
    %124 = vmatprep.subr.mxu0 0.0
    %125 = vmatpush1.msra.mxu0 0.0
    %126 = vmatprep.mubr.f32.mxu0 0.0
    %127 = vmatmul.mubr.f32.gmra.mrb[0].mxu0 %v60
    %v128 = vpop.f32.mrb[0].mxu0
    %v129 = vadd.f32 0.0, %v128
    %v130 = vpop.f32.mrb[0].mxu0
    %131 = vdwg.mxu0
    %132 = vst [vmem:[#allocation7] sm:$0x3] %v129
    // Predicated region
    $region22: #{tpu_custom_call.1} parent=1 // pred_check
      _
    $region23: #{tpu_custom_call.1} parent=1 // pred_check_branch
      %134 = sbr.rel (0) target = $region25
    $region24: #{tpu_custom_call.1} parent=1 // pred_region
      %s136 = ssub.s32 32, 32
      %137 = vsyncadd [#allocation4], %s136
      %s139 = sshll.u32 [#allocation7], 4
      %s140 = int_to_ptr.vmem [resolvable:$true] %s139
      %142 = dma.vmem_to_hbm [thread:$0]  %s140, 32, %s3, [#allocation4]
    $region25: #{tpu_custom_call.1} parent=1 // pred_fallthru
      _
    // Predicated region
    $region26: #{tpu_custom_call.1} parent=1 // pred_check
      _
    $region27: #{tpu_custom_call.1} parent=1 // pred_check_branch
      %144 = sbr.rel (0) target = $region29
    $region28: #{tpu_custom_call.1} parent=1 // pred_region
      %145 = dma.done [#allocation4], 32
    $region29: #{tpu_custom_call.1} parent=1 // pred_fallthru
      _
    %146 = vsyncpa [#allocation3], 1
    %147 = vsyncpa [#allocation6], 1
    %148 = vsyncpa [#allocation4], 1

</llo_original>
